<compile_context>
chip_gen: v7x
topology: tpu7x:2x2x1
jax: 0.10.0
libtpu: 0.0.40
codegen_flags: <defaults>
</compile_context>

<pallas_src>
import functools
import math

import jax
import jax.numpy as jnp
from jax.experimental import pallas as pl
from jax.experimental.pallas import tpu as pltpu

_LANE = 128         # TPU lane width
_SUBLANE = 8        # sublane width; also the H-chunk size
_LANE_BLOCK = 1024  # in-kernel lane sub-block (bounds vreg pressure)


def _round_up(a, b):
    return ((a + b - 1) // b) * b


def _deepset_or_kernel(params_ref, x_ref, o_ref, *, lane_block, h_chunk,
                       compute_dtype):
    # params_ref: (H_pad, 4) f32, columns = [w_hidden, b_hidden, w_linear, b_linear]
    # x_ref / o_ref: (1, TB) f32 -- flattened elements lane-dense on last axis.
    h_pad = params_ref.shape[0]
    tb = x_ref.shape[1]
    n_h_chunks = h_pad // h_chunk
    b2 = params_ref[0:1, 3:4]                                   # (1, 1) f32

    def do_lane_block(off):
        x = x_ref[:, pl.ds(off, lane_block)].astype(compute_dtype)   # (1, LB)
        # Chunked accumulation over H: never materializes an (H, TB) temp,
        # accumulator stays a handful of vregs, accumulation in f32.
        acc = jnp.zeros((h_chunk, lane_block), jnp.float32)
        for c in range(n_h_chunks):
            rows = slice(c * h_chunk, (c + 1) * h_chunk)
            w1 = params_ref[rows, 0:1].astype(compute_dtype)          # (HC, 1)
            b1 = params_ref[rows, 1:2].astype(compute_dtype)
            w2 = params_ref[rows, 2:3].astype(compute_dtype)
            h = jnp.maximum(w1 * x + b1, 0.0)                         # (HC, LB)
            acc = acc + (h * w2).astype(jnp.float32)
        z = jnp.sum(acc, axis=0, keepdims=True) + b2                  # (1, LB)
        o_ref[:, pl.ds(off, lane_block)] = jax.nn.sigmoid(z).astype(o_ref.dtype)

    n_blocks = tb // lane_block
    if n_blocks <= 2:
        for j in range(n_blocks):                  # static offsets, full LLO view
            do_lane_block(j * lane_block)
    else:
        def body(j, carry):
            do_lane_block(pl.multiple_of(j * lane_block, lane_block))
            return carry
        jax.lax.fori_loop(0, n_blocks, body, 0)


def deepset_or_forward(x, w_hidden, b_hidden, w_linear, b_linear, *,
                       block_n=8192, compute_dtype=jnp.float32):
    """x: (..., 1) float array. Returns sigmoid(linear(relu(hidden(x)))), same shape."""
    if x.shape[-1] != 1:
        raise ValueError("DeepSetOR expects in_features == 1 (trailing dim of 1).")
    hidden_size = int(w_hidden.shape[0])
    orig_shape = x.shape

    n = 1
    for d in orig_shape[:-1]:
        n *= int(d)

    # ---- tile selection: lane-dense, always 128-aligned, big enough to
    # amortize per-grid-step overhead, capped so the grid keeps >= 2 steps
    # (v7x has 2 TensorCores) once there is enough work.
    n_ceil = _round_up(n, _LANE)
    if n_ceil >= _LANE_BLOCK:
        tb = min(_round_up(block_n, _LANE_BLOCK), _round_up(n_ceil, _LANE_BLOCK))
        if n_ceil >= 2 * _LANE_BLOCK:
            tb = min(tb, _round_up((n_ceil + 1) // 2, _LANE_BLOCK))
        lane_block = _LANE_BLOCK
    else:
        tb = n_ceil
        lane_block = tb
    n_pad = _round_up(n, tb)
    grid = (n_pad // tb,)

    # ---- input: skip the pad copy entirely when already tile-aligned.
    x_flat = x.reshape(1, n).astype(jnp.float32)
    x_in = x_flat if n_pad == n else jnp.pad(x_flat, ((0, 0), (0, n_pad - n)))

    # ---- pack all params in one resident (H_pad, 4) f32 blob (single DMA);
    # pad H to a sublane multiple with zero rows (relu(0)=0, w2=0 -> no-op).
    h_pad = _round_up(hidden_size, _SUBLANE)

    def _pad_h(v):
        v = jnp.asarray(v, jnp.float32).reshape(-1)
        return jnp.pad(v, (0, h_pad - hidden_size))

    w1 = _pad_h(w_hidden[:, 0])
    b1 = _pad_h(b_hidden)
    w2 = _pad_h(w_linear[0, :])
    b2 = jnp.broadcast_to(jnp.asarray(b_linear, jnp.float32).reshape(()), (h_pad,))
    params = jnp.stack([w1, b1, w2, b2], axis=-1)                 # (h_pad, 4)

    kernel = functools.partial(
        _deepset_or_kernel, lane_block=lane_block, h_chunk=_SUBLANE,
        compute_dtype=compute_dtype)

    out = pl.pallas_call(
        kernel,
        out_shape=jax.ShapeDtypeStruct((1, n_pad), jnp.float32),
        grid_spec=pltpu.PrefetchScalarGridSpec(
            num_scalar_prefetch=0,
            grid=grid,
            in_specs=[
                pl.BlockSpec((h_pad, 4), lambda i: (0, 0)),   # resident params
                pl.BlockSpec((1, tb), lambda i: (0, i)),      # lane-dense x tile
            ],
            out_specs=pl.BlockSpec((1, tb), lambda i: (0, i)),  # lane-dense out
        ),
        compiler_params=pltpu.CompilerParams(
            dimension_semantics=("parallel",),
        ),
    )(params, x_in)

    return out[0, :n].reshape(orig_shape)


def init_params(key, hidden_size=256):
    # PyTorch nn.Linear default init: U(-1/sqrt(fan_in), 1/sqrt(fan_in)).
    k = jax.random.split(key, 4)
    w_hidden = jax.random.uniform(k[0], (hidden_size, 1), jnp.float32, -1.0, 1.0)
    b_hidden = jax.random.uniform(k[1], (hidden_size,), jnp.float32, -1.0, 1.0)
    bound = 1.0 / math.sqrt(hidden_size)
    w_linear = jax.random.uniform(k[2], (1, hidden_size), jnp.float32, -bound, bound)
    b_linear = jax.random.uniform(k[3], (1,), jnp.float32, -bound, bound)
    return w_hidden, b_hidden, w_linear, b_linear


def reference_forward(x, w_hidden, b_hidden, w_linear, b_linear):
    # Pure-elementwise f32 reference (no matmul -> no TPU default-matmul-
    # precision surprises for the K=1 / N=1 contractions).
    h = jnp.maximum(x * w_hidden[:, 0] + b_hidden, 0.0)                # (..., H)
    z = jnp.sum(h * w_linear[0, :], axis=-1, keepdims=True) + b_linear
    return jax.nn.sigmoid(z)


if __name__ == "__main__":
    key = jax.random.PRNGKey(0)
    kx1, kx2, kp = jax.random.split(key, 3)

    hidden_size = 256
    params = init_params(kp, hidden_size)

    # Small DeepSet-style input: (batch, n_obj, 1) probabilities. Single tile.
    x_small = jax.random.uniform(kx1, (4, 8, 1), jnp.float32)
    out_small = jax.block_until_ready(deepset_or_forward(x_small, *params))
    ref_small = reference_forward(x_small, *params)
    assert out_small.shape == x_small.shape
    assert jnp.allclose(out_small, ref_small, atol=1e-5, rtol=1e-5)

    # Larger input: exercises multi-step grid + in-kernel lane-block loop.
    x_big = jax.random.uniform(kx2, (2, 8192, 1), jnp.float32)
    out_big = jax.block_until_ready(deepset_or_forward(x_big, *params))
    ref_big = reference_forward(x_big, *params)
    assert out_big.shape == x_big.shape
    assert jnp.allclose(out_big, ref_big, atol=1e-5, rtol=1e-5)

    # Optional bf16 elementwise path (v6e/v7x VALU throughput), f32 accumulate.
    out_bf16 = jax.block_until_ready(
        deepset_or_forward(x_big, *params, compute_dtype=jnp.bfloat16))
    assert jnp.allclose(out_bf16, ref_big, atol=3e-2, rtol=0)

    print("KERNEL_OK")
</pallas_src>

<mosaic_0001>
module attributes {stable_mosaic.version = 11 : i64} {
  func.func @_deepset_or_kernel(%arg0: i32, %arg1: memref<256x4xf32, #tpu.memory_space<vmem>>, %arg2: memref<1x128xf32, #tpu.memory_space<vmem>>, %arg3: memref<1x128xf32, #tpu.memory_space<vmem>>) attributes {dimension_semantics = [#tpu.dimension_semantics<parallel>], iteration_bounds = array<i64: 1>, scalar_prefetch = 0 : i64, scratch_operands = 0 : i64, tpu.core_type = #tpu.core_type<tc>, window_params = [{pipeline_mode = #tpu.pipeline_mode<synchronous>, transform_indices = @transform_0, window_bounds = array<i64: 256, 4>}, {transform_indices = @transform_1, window_bounds = array<i64: 1, 128>}, {transform_indices = @transform_2, window_bounds = array<i64: 1, 128>}]} {
    %c0 = arith.constant 0 : index
    %c3 = arith.constant 3 : index
    %0 = vector.load %arg1[%c0, %c3] : memref<256x4xf32, #tpu.memory_space<vmem>>, vector<1x1xf32>
    %c0_0 = arith.constant 0 : index
    %c0_1 = arith.constant 0 : index
    %1 = vector.load %arg2[%c0_0, %c0_1] : memref<1x128xf32, #tpu.memory_space<vmem>>, vector<1x128xf32>
    %cst = arith.constant 0.000000e+00 : f32
    %2 = vector.broadcast %cst : f32 to vector<8x128xf32>
    %c0_2 = arith.constant 0 : index
    %c0_3 = arith.constant 0 : index
    %3 = vector.load %arg1[%c0_2, %c0_3] : memref<256x4xf32, #tpu.memory_space<vmem>>, vector<8x1xf32>
    %c0_4 = arith.constant 0 : index
    %c1 = arith.constant 1 : index
    %4 = vector.load %arg1[%c0_4, %c1] : memref<256x4xf32, #tpu.memory_space<vmem>>, vector<8x1xf32>
    %c0_5 = arith.constant 0 : index
    %c2 = arith.constant 2 : index
    %5 = vector.load %arg1[%c0_5, %c2] : memref<256x4xf32, #tpu.memory_space<vmem>>, vector<8x1xf32>
    %6 = vector.broadcast %3 : vector<8x1xf32> to vector<8x128xf32>
    %7 = vector.broadcast %1 : vector<1x128xf32> to vector<8x128xf32>
    %8 = arith.mulf %6, %7 : vector<8x128xf32>
    %9 = vector.broadcast %4 : vector<8x1xf32> to vector<8x128xf32>
    %10 = arith.addf %8, %9 : vector<8x128xf32>
    %cst_6 = arith.constant 0.000000e+00 : f32
    %11 = vector.broadcast %cst_6 : f32 to vector<8x128xf32>
    %12 = arith.maximumf %10, %11 : vector<8x128xf32>
    %13 = vector.broadcast %5 : vector<8x1xf32> to vector<8x128xf32>
    %14 = arith.mulf %12, %13 : vector<8x128xf32>
    %15 = arith.addf %2, %14 : vector<8x128xf32>
    %c8 = arith.constant 8 : index
    %c0_7 = arith.constant 0 : index
    %16 = vector.load %arg1[%c8, %c0_7] : memref<256x4xf32, #tpu.memory_space<vmem>>, vector<8x1xf32>
    %c8_8 = arith.constant 8 : index
    %c1_9 = arith.constant 1 : index
    %17 = vector.load %arg1[%c8_8, %c1_9] : memref<256x4xf32, #tpu.memory_space<vmem>>, vector<8x1xf32>
    %c8_10 = arith.constant 8 : index
    %c2_11 = arith.constant 2 : index
    %18 = vector.load %arg1[%c8_10, %c2_11] : memref<256x4xf32, #tpu.memory_space<vmem>>, vector<8x1xf32>
    %19 = vector.broadcast %16 : vector<8x1xf32> to vector<8x128xf32>
    %20 = vector.broadcast %1 : vector<1x128xf32> to vector<8x128xf32>
    %21 = arith.mulf %19, %20 : vector<8x128xf32>
    %22 = vector.broadcast %17 : vector<8x1xf32> to vector<8x128xf32>
    %23 = arith.addf %21, %22 : vector<8x128xf32>
    %cst_12 = arith.constant 0.000000e+00 : f32
    %24 = vector.broadcast %cst_12 : f32 to vector<8x128xf32>
    %25 = arith.maximumf %23, %24 : vector<8x128xf32>
    %26 = vector.broadcast %18 : vector<8x1xf32> to vector<8x128xf32>
    %27 = arith.mulf %25, %26 : vector<8x128xf32>
    %28 = arith.addf %15, %27 : vector<8x128xf32>
    %c16 = arith.constant 16 : index
    %c0_13 = arith.constant 0 : index
    %29 = vector.load %arg1[%c16, %c0_13] : memref<256x4xf32, #tpu.memory_space<vmem>>, vector<8x1xf32>
    %c16_14 = arith.constant 16 : index
    %c1_15 = arith.constant 1 : index
    %30 = vector.load %arg1[%c16_14, %c1_15] : memref<256x4xf32, #tpu.memory_space<vmem>>, vector<8x1xf32>
    %c16_16 = arith.constant 16 : index
    %c2_17 = arith.constant 2 : index
    %31 = vector.load %arg1[%c16_16, %c2_17] : memref<256x4xf32, #tpu.memory_space<vmem>>, vector<8x1xf32>
    %32 = vector.broadcast %29 : vector<8x1xf32> to vector<8x128xf32>
    %33 = vector.broadcast %1 : vector<1x128xf32> to vector<8x128xf32>
    %34 = arith.mulf %32, %33 : vector<8x128xf32>
    %35 = vector.broadcast %30 : vector<8x1xf32> to vector<8x128xf32>
    %36 = arith.addf %34, %35 : vector<8x128xf32>
    %cst_18 = arith.constant 0.000000e+00 : f32
    %37 = vector.broadcast %cst_18 : f32 to vector<8x128xf32>
    %38 = arith.maximumf %36, %37 : vector<8x128xf32>
    %39 = vector.broadcast %31 : vector<8x1xf32> to vector<8x128xf32>
    %40 = arith.mulf %38, %39 : vector<8x128xf32>
    %41 = arith.addf %28, %40 : vector<8x128xf32>
    %c24 = arith.constant 24 : index
    %c0_19 = arith.constant 0 : index
    %42 = vector.load %arg1[%c24, %c0_19] : memref<256x4xf32, #tpu.memory_space<vmem>>, vector<8x1xf32>
    %c24_20 = arith.constant 24 : index
    %c1_21 = arith.constant 1 : index
    %43 = vector.load %arg1[%c24_20, %c1_21] : memref<256x4xf32, #tpu.memory_space<vmem>>, vector<8x1xf32>
    %c24_22 = arith.constant 24 : index
    %c2_23 = arith.constant 2 : index
    %44 = vector.load %arg1[%c24_22, %c2_23] : memref<256x4xf32, #tpu.memory_space<vmem>>, vector<8x1xf32>
    %45 = vector.broadcast %42 : vector<8x1xf32> to vector<8x128xf32>
    %46 = vector.broadcast %1 : vector<1x128xf32> to vector<8x128xf32>
    %47 = arith.mulf %45, %46 : vector<8x128xf32>
    %48 = vector.broadcast %43 : vector<8x1xf32> to vector<8x128xf32>
    %49 = arith.addf %47, %48 : vector<8x128xf32>
    %cst_24 = arith.constant 0.000000e+00 : f32
    %50 = vector.broadcast %cst_24 : f32 to vector<8x128xf32>
    %51 = arith.maximumf %49, %50 : vector<8x128xf32>
    %52 = vector.broadcast %44 : vector<8x1xf32> to vector<8x128xf32>
    %53 = arith.mulf %51, %52 : vector<8x128xf32>
    %54 = arith.addf %41, %53 : vector<8x128xf32>
    %c32 = arith.constant 32 : index
    %c0_25 = arith.constant 0 : index
    %55 = vector.load %arg1[%c32, %c0_25] : memref<256x4xf32, #tpu.memory_space<vmem>>, vector<8x1xf32>
    %c32_26 = arith.constant 32 : index
    %c1_27 = arith.constant 1 : index
    %56 = vector.load %arg1[%c32_26, %c1_27] : memref<256x4xf32, #tpu.memory_space<vmem>>, vector<8x1xf32>
    %c32_28 = arith.constant 32 : index
    %c2_29 = arith.constant 2 : index
    %57 = vector.load %arg1[%c32_28, %c2_29] : memref<256x4xf32, #tpu.memory_space<vmem>>, vector<8x1xf32>
    %58 = vector.broadcast %55 : vector<8x1xf32> to vector<8x128xf32>
    %59 = vector.broadcast %1 : vector<1x128xf32> to vector<8x128xf32>
    %60 = arith.mulf %58, %59 : vector<8x128xf32>
    %61 = vector.broadcast %56 : vector<8x1xf32> to vector<8x128xf32>
    %62 = arith.addf %60, %61 : vector<8x128xf32>
    %cst_30 = arith.constant 0.000000e+00 : f32
    %63 = vector.broadcast %cst_30 : f32 to vector<8x128xf32>
    %64 = arith.maximumf %62, %63 : vector<8x128xf32>
    %65 = vector.broadcast %57 : vector<8x1xf32> to vector<8x128xf32>
    %66 = arith.mulf %64, %65 : vector<8x128xf32>
    %67 = arith.addf %54, %66 : vector<8x128xf32>
    %c40 = arith.constant 40 : index
    %c0_31 = arith.constant 0 : index
    %68 = vector.load %arg1[%c40, %c0_31] : memref<256x4xf32, #tpu.memory_space<vmem>>, vector<8x1xf32>
    %c40_32 = arith.constant 40 : index
    %c1_33 = arith.constant 1 : index
    %69 = vector.load %arg1[%c40_32, %c1_33] : memref<256x4xf32, #tpu.memory_space<vmem>>, vector<8x1xf32>
    %c40_34 = arith.constant 40 : index
    %c2_35 = arith.constant 2 : index
    %70 = vector.load %arg1[%c40_34, %c2_35] : memref<256x4xf32, #tpu.memory_space<vmem>>, vector<8x1xf32>
    %71 = vector.broadcast %68 : vector<8x1xf32> to vector<8x128xf32>
    %72 = vector.broadcast %1 : vector<1x128xf32> to vector<8x128xf32>
    %73 = arith.mulf %71, %72 : vector<8x128xf32>
    %74 = vector.broadcast %69 : vector<8x1xf32> to vector<8x128xf32>
    %75 = arith.addf %73, %74 : vector<8x128xf32>
    %cst_36 = arith.constant 0.000000e+00 : f32
    %76 = vector.broadcast %cst_36 : f32 to vector<8x128xf32>
    %77 = arith.maximumf %75, %76 : vector<8x128xf32>
    %78 = vector.broadcast %70 : vector<8x1xf32> to vector<8x128xf32>
    %79 = arith.mulf %77, %78 : vector<8x128xf32>
    %80 = arith.addf %67, %79 : vector<8x128xf32>
    %c48 = arith.constant 48 : index
    %c0_37 = arith.constant 0 : index
    %81 = vector.load %arg1[%c48, %c0_37] : memref<256x4xf32, #tpu.memory_space<vmem>>, vector<8x1xf32>
    %c48_38 = arith.constant 48 : index
    %c1_39 = arith.constant 1 : index
    %82 = vector.load %arg1[%c48_38, %c1_39] : memref<256x4xf32, #tpu.memory_space<vmem>>, vector<8x1xf32>
    %c48_40 = arith.constant 48 : index
    %c2_41 = arith.constant 2 : index
    %83 = vector.load %arg1[%c48_40, %c2_41] : memref<256x4xf32, #tpu.memory_space<vmem>>, vector<8x1xf32>
    %84 = vector.broadcast %81 : vector<8x1xf32> to vector<8x128xf32>
    %85 = vector.broadcast %1 : vector<1x128xf32> to vector<8x128xf32>
    %86 = arith.mulf %84, %85 : vector<8x128xf32>
    %87 = vector.broadcast %82 : vector<8x1xf32> to vector<8x128xf32>
    %88 = arith.addf %86, %87 : vector<8x128xf32>
    %cst_42 = arith.constant 0.000000e+00 : f32
    %89 = vector.broadcast %cst_42 : f32 to vector<8x128xf32>
    %90 = arith.maximumf %88, %89 : vector<8x128xf32>
    %91 = vector.broadcast %83 : vector<8x1xf32> to vector<8x128xf32>
    %92 = arith.mulf %90, %91 : vector<8x128xf32>
    %93 = arith.addf %80, %92 : vector<8x128xf32>
    %c56 = arith.constant 56 : index
    %c0_43 = arith.constant 0 : index
    %94 = vector.load %arg1[%c56, %c0_43] : memref<256x4xf32, #tpu.memory_space<vmem>>, vector<8x1xf32>
    %c56_44 = arith.constant 56 : index
    %c1_45 = arith.constant 1 : index
    %95 = vector.load %arg1[%c56_44, %c1_45] : memref<256x4xf32, #tpu.memory_space<vmem>>, vector<8x1xf32>
    %c56_46 = arith.constant 56 : index
    %c2_47 = arith.constant 2 : index
    %96 = vector.load %arg1[%c56_46, %c2_47] : memref<256x4xf32, #tpu.memory_space<vmem>>, vector<8x1xf32>
    %97 = vector.broadcast %94 : vector<8x1xf32> to vector<8x128xf32>
    %98 = vector.broadcast %1 : vector<1x128xf32> to vector<8x128xf32>
    %99 = arith.mulf %97, %98 : vector<8x128xf32>
    %100 = vector.broadcast %95 : vector<8x1xf32> to vector<8x128xf32>
    %101 = arith.addf %99, %100 : vector<8x128xf32>
    %cst_48 = arith.constant 0.000000e+00 : f32
    %102 = vector.broadcast %cst_48 : f32 to vector<8x128xf32>
    %103 = arith.maximumf %101, %102 : vector<8x128xf32>
    %104 = vector.broadcast %96 : vector<8x1xf32> to vector<8x128xf32>
    %105 = arith.mulf %103, %104 : vector<8x128xf32>
    %106 = arith.addf %93, %105 : vector<8x128xf32>
    %c64 = arith.constant 64 : index
    %c0_49 = arith.constant 0 : index
    %107 = vector.load %arg1[%c64, %c0_49] : memref<256x4xf32, #tpu.memory_space<vmem>>, vector<8x1xf32>
    %c64_50 = arith.constant 64 : index
    %c1_51 = arith.constant 1 : index
    %108 = vector.load %arg1[%c64_50, %c1_51] : memref<256x4xf32, #tpu.memory_space<vmem>>, vector<8x1xf32>
    %c64_52 = arith.constant 64 : index
    %c2_53 = arith.constant 2 : index
    %109 = vector.load %arg1[%c64_52, %c2_53] : memref<256x4xf32, #tpu.memory_space<vmem>>, vector<8x1xf32>
    %110 = vector.broadcast %107 : vector<8x1xf32> to vector<8x128xf32>
    %111 = vector.broadcast %1 : vector<1x128xf32> to vector<8x128xf32>
    %112 = arith.mulf %110, %111 : vector<8x128xf32>
    %113 = vector.broadcast %108 : vector<8x1xf32> to vector<8x128xf32>
    %114 = arith.addf %112, %113 : vector<8x128xf32>
    %cst_54 = arith.constant 0.000000e+00 : f32
    %115 = vector.broadcast %cst_54 : f32 to vector<8x128xf32>
    %116 = arith.maximumf %114, %115 : vector<8x128xf32>
    %117 = vector.broadcast %109 : vector<8x1xf32> to vector<8x128xf32>
    %118 = arith.mulf %116, %117 : vector<8x128xf32>
    %119 = arith.addf %106, %118 : vector<8x128xf32>
    %c72 = arith.constant 72 : index
    %c0_55 = arith.constant 0 : index
    %120 = vector.load %arg1[%c72, %c0_55] : memref<256x4xf32, #tpu.memory_space<vmem>>, vector<8x1xf32>
    %c72_56 = arith.constant 72 : index
    %c1_57 = arith.constant 1 : index
    %121 = vector.load %arg1[%c72_56, %c1_57] : memref<256x4xf32, #tpu.memory_space<vmem>>, vector<8x1xf32>
    %c72_58 = arith.constant 72 : index
    %c2_59 = arith.constant 2 : index
    %122 = vector.load %arg1[%c72_58, %c2_59] : memref<256x4xf32, #tpu.memory_space<vmem>>, vector<8x1xf32>
    %123 = vector.broadcast %120 : vector<8x1xf32> to vector<8x128xf32>
    %124 = vector.broadcast %1 : vector<1x128xf32> to vector<8x128xf32>
    %125 = arith.mulf %123, %124 : vector<8x128xf32>
    %126 = vector.broadcast %121 : vector<8x1xf32> to vector<8x128xf32>
    %127 = arith.addf %125, %126 : vector<8x128xf32>
    %cst_60 = arith.constant 0.000000e+00 : f32
    %128 = vector.broadcast %cst_60 : f32 to vector<8x128xf32>
    %129 = arith.maximumf %127, %128 : vector<8x128xf32>
    %130 = vector.broadcast %122 : vector<8x1xf32> to vector<8x128xf32>
    %131 = arith.mulf %129, %130 : vector<8x128xf32>
    %132 = arith.addf %119, %131 : vector<8x128xf32>
    %c80 = arith.constant 80 : index
    %c0_61 = arith.constant 0 : index
    %133 = vector.load %arg1[%c80, %c0_61] : memref<256x4xf32, #tpu.memory_space<vmem>>, vector<8x1xf32>
    %c80_62 = arith.constant 80 : index
    %c1_63 = arith.constant 1 : index
    %134 = vector.load %arg1[%c80_62, %c1_63] : memref<256x4xf32, #tpu.memory_space<vmem>>, vector<8x1xf32>
    %c80_64 = arith.constant 80 : index
    %c2_65 = arith.constant 2 : index
    %135 = vector.load %arg1[%c80_64, %c2_65] : memref<256x4xf32, #tpu.memory_space<vmem>>, vector<8x1xf32>
    %136 = vector.broadcast %133 : vector<8x1xf32> to vector<8x128xf32>
    %137 = vector.broadcast %1 : vector<1x128xf32> to vector<8x128xf32>
    %138 = arith.mulf %136, %137 : vector<8x128xf32>
    %139 = vector.broadcast %134 : vector<8x1xf32> to vector<8x128xf32>
    %140 = arith.addf %138, %139 : vector<8x128xf32>
    %cst_66 = arith.constant 0.000000e+00 : f32
    %141 = vector.broadcast %cst_66 : f32 to vector<8x128xf32>
    %142 = arith.maximumf %140, %141 : vector<8x128xf32>
    %143 = vector.broadcast %135 : vector<8x1xf32> to vector<8x128xf32>
    %144 = arith.mulf %142, %143 : vector<8x128xf32>
    %145 = arith.addf %132, %144 : vector<8x128xf32>
    %c88 = arith.constant 88 : index
    %c0_67 = arith.constant 0 : index
    %146 = vector.load %arg1[%c88, %c0_67] : memref<256x4xf32, #tpu.memory_space<vmem>>, vector<8x1xf32>
    %c88_68 = arith.constant 88 : index
    %c1_69 = arith.constant 1 : index
    %147 = vector.load %arg1[%c88_68, %c1_69] : memref<256x4xf32, #tpu.memory_space<vmem>>, vector<8x1xf32>
    %c88_70 = arith.constant 88 : index
    %c2_71 = arith.constant 2 : index
    %148 = vector.load %arg1[%c88_70, %c2_71] : memref<256x4xf32, #tpu.memory_space<vmem>>, vector<8x1xf32>
    %149 = vector.broadcast %146 : vector<8x1xf32> to vector<8x128xf32>
    %150 = vector.broadcast %1 : vector<1x128xf32> to vector<8x128xf32>
    %151 = arith.mulf %149, %150 : vector<8x128xf32>
    %152 = vector.broadcast %147 : vector<8x1xf32> to vector<8x128xf32>
    %153 = arith.addf %151, %152 : vector<8x128xf32>
    %cst_72 = arith.constant 0.000000e+00 : f32
    %154 = vector.broadcast %cst_72 : f32 to vector<8x128xf32>
    %155 = arith.maximumf %153, %154 : vector<8x128xf32>
    %156 = vector.broadcast %148 : vector<8x1xf32> to vector<8x128xf32>
    %157 = arith.mulf %155, %156 : vector<8x128xf32>
    %158 = arith.addf %145, %157 : vector<8x128xf32>
    %c96 = arith.constant 96 : index
    %c0_73 = arith.constant 0 : index
    %159 = vector.load %arg1[%c96, %c0_73] : memref<256x4xf32, #tpu.memory_space<vmem>>, vector<8x1xf32>
    %c96_74 = arith.constant 96 : index
    %c1_75 = arith.constant 1 : index
    %160 = vector.load %arg1[%c96_74, %c1_75] : memref<256x4xf32, #tpu.memory_space<vmem>>, vector<8x1xf32>
    %c96_76 = arith.constant 96 : index
    %c2_77 = arith.constant 2 : index
    %161 = vector.load %arg1[%c96_76, %c2_77] : memref<256x4xf32, #tpu.memory_space<vmem>>, vector<8x1xf32>
    %162 = vector.broadcast %159 : vector<8x1xf32> to vector<8x128xf32>
    %163 = vector.broadcast %1 : vector<1x128xf32> to vector<8x128xf32>
    %164 = arith.mulf %162, %163 : vector<8x128xf32>
    %165 = vector.broadcast %160 : vector<8x1xf32> to vector<8x128xf32>
    %166 = arith.addf %164, %165 : vector<8x128xf32>
    %cst_78 = arith.constant 0.000000e+00 : f32
    %167 = vector.broadcast %cst_78 : f32 to vector<8x128xf32>
    %168 = arith.maximumf %166, %167 : vector<8x128xf32>
    %169 = vector.broadcast %161 : vector<8x1xf32> to vector<8x128xf32>
    %170 = arith.mulf %168, %169 : vector<8x128xf32>
    %171 = arith.addf %158, %170 : vector<8x128xf32>
    %c104 = arith.constant 104 : index
    %c0_79 = arith.constant 0 : index
    %172 = vector.load %arg1[%c104, %c0_79] : memref<256x4xf32, #tpu.memory_space<vmem>>, vector<8x1xf32>
    %c104_80 = arith.constant 104 : index
    %c1_81 = arith.constant 1 : index
    %173 = vector.load %arg1[%c104_80, %c1_81] : memref<256x4xf32, #tpu.memory_space<vmem>>, vector<8x1xf32>
    %c104_82 = arith.constant 104 : index
    %c2_83 = arith.constant 2 : index
    %174 = vector.load %arg1[%c104_82, %c2_83] : memref<256x4xf32, #tpu.memory_space<vmem>>, vector<8x1xf32>
    %175 = vector.broadcast %172 : vector<8x1xf32> to vector<8x128xf32>
    %176 = vector.broadcast %1 : vector<1x128xf32> to vector<8x128xf32>
    %177 = arith.mulf %175, %176 : vector<8x128xf32>
    %178 = vector.broadcast %173 : vector<8x1xf32> to vector<8x128xf32>
    %179 = arith.addf %177, %178 : vector<8x128xf32>
    %cst_84 = arith.constant 0.000000e+00 : f32
    %180 = vector.broadcast %cst_84 : f32 to vector<8x128xf32>
    %181 = arith.maximumf %179, %180 : vector<8x128xf32>
    %182 = vector.broadcast %174 : vector<8x1xf32> to vector<8x128xf32>
    %183 = arith.mulf %181, %182 : vector<8x128xf32>
    %184 = arith.addf %171, %183 : vector<8x128xf32>
    %c112 = arith.constant 112 : index
    %c0_85 = arith.constant 0 : index
    %185 = vector.load %arg1[%c112, %c0_85] : memref<256x4xf32, #tpu.memory_space<vmem>>, vector<8x1xf32>
    %c112_86 = arith.constant 112 : index
    %c1_87 = arith.constant 1 : index
    %186 = vector.load %arg1[%c112_86, %c1_87] : memref<256x4xf32, #tpu.memory_space<vmem>>, vector<8x1xf32>
    %c112_88 = arith.constant 112 : index
    %c2_89 = arith.constant 2 : index
    %187 = vector.load %arg1[%c112_88, %c2_89] : memref<256x4xf32, #tpu.memory_space<vmem>>, vector<8x1xf32>
    %188 = vector.broadcast %185 : vector<8x1xf32> to vector<8x128xf32>
    %189 = vector.broadcast %1 : vector<1x128xf32> to vector<8x128xf32>
    %190 = arith.mulf %188, %189 : vector<8x128xf32>
    %191 = vector.broadcast %186 : vector<8x1xf32> to vector<8x128xf32>
    %192 = arith.addf %190, %191 : vector<8x128xf32>
    %cst_90 = arith.constant 0.000000e+00 : f32
    %193 = vector.broadcast %cst_90 : f32 to vector<8x128xf32>
    %194 = arith.maximumf %192, %193 : vector<8x128xf32>
    %195 = vector.broadcast %187 : vector<8x1xf32> to vector<8x128xf32>
    %196 = arith.mulf %194, %195 : vector<8x128xf32>
    %197 = arith.addf %184, %196 : vector<8x128xf32>
    %c120 = arith.constant 120 : index
    %c0_91 = arith.constant 0 : index
    %198 = vector.load %arg1[%c120, %c0_91] : memref<256x4xf32, #tpu.memory_space<vmem>>, vector<8x1xf32>
    %c120_92 = arith.constant 120 : index
    %c1_93 = arith.constant 1 : index
    %199 = vector.load %arg1[%c120_92, %c1_93] : memref<256x4xf32, #tpu.memory_space<vmem>>, vector<8x1xf32>
    %c120_94 = arith.constant 120 : index
    %c2_95 = arith.constant 2 : index
    %200 = vector.load %arg1[%c120_94, %c2_95] : memref<256x4xf32, #tpu.memory_space<vmem>>, vector<8x1xf32>
    %201 = vector.broadcast %198 : vector<8x1xf32> to vector<8x128xf32>
    %202 = vector.broadcast %1 : vector<1x128xf32> to vector<8x128xf32>
    %203 = arith.mulf %201, %202 : vector<8x128xf32>
    %204 = vector.broadcast %199 : vector<8x1xf32> to vector<8x128xf32>
    %205 = arith.addf %203, %204 : vector<8x128xf32>
    %cst_96 = arith.constant 0.000000e+00 : f32
    %206 = vector.broadcast %cst_96 : f32 to vector<8x128xf32>
    %207 = arith.maximumf %205, %206 : vector<8x128xf32>
    %208 = vector.broadcast %200 : vector<8x1xf32> to vector<8x128xf32>
    %209 = arith.mulf %207, %208 : vector<8x128xf32>
    %210 = arith.addf %197, %209 : vector<8x128xf32>
    %c128 = arith.constant 128 : index
    %c0_97 = arith.constant 0 : index
    %211 = vector.load %arg1[%c128, %c0_97] : memref<256x4xf32, #tpu.memory_space<vmem>>, vector<8x1xf32>
    %c128_98 = arith.constant 128 : index
    %c1_99 = arith.constant 1 : index
    %212 = vector.load %arg1[%c128_98, %c1_99] : memref<256x4xf32, #tpu.memory_space<vmem>>, vector<8x1xf32>
    %c128_100 = arith.constant 128 : index
    %c2_101 = arith.constant 2 : index
    %213 = vector.load %arg1[%c128_100, %c2_101] : memref<256x4xf32, #tpu.memory_space<vmem>>, vector<8x1xf32>
    %214 = vector.broadcast %211 : vector<8x1xf32> to vector<8x128xf32>
    %215 = vector.broadcast %1 : vector<1x128xf32> to vector<8x128xf32>
    %216 = arith.mulf %214, %215 : vector<8x128xf32>
    %217 = vector.broadcast %212 : vector<8x1xf32> to vector<8x128xf32>
    %218 = arith.addf %216, %217 : vector<8x128xf32>
    %cst_102 = arith.constant 0.000000e+00 : f32
    %219 = vector.broadcast %cst_102 : f32 to vector<8x128xf32>
    %220 = arith.maximumf %218, %219 : vector<8x128xf32>
    %221 = vector.broadcast %213 : vector<8x1xf32> to vector<8x128xf32>
    %222 = arith.mulf %220, %221 : vector<8x128xf32>
    %223 = arith.addf %210, %222 : vector<8x128xf32>
    %c136 = arith.constant 136 : index
    %c0_103 = arith.constant 0 : index
    %224 = vector.load %arg1[%c136, %c0_103] : memref<256x4xf32, #tpu.memory_space<vmem>>, vector<8x1xf32>
    %c136_104 = arith.constant 136 : index
    %c1_105 = arith.constant 1 : index
    %225 = vector.load %arg1[%c136_104, %c1_105] : memref<256x4xf32, #tpu.memory_space<vmem>>, vector<8x1xf32>
    %c136_106 = arith.constant 136 : index
    %c2_107 = arith.constant 2 : index
    %226 = vector.load %arg1[%c136_106, %c2_107] : memref<256x4xf32, #tpu.memory_space<vmem>>, vector<8x1xf32>
    %227 = vector.broadcast %224 : vector<8x1xf32> to vector<8x128xf32>
    %228 = vector.broadcast %1 : vector<1x128xf32> to vector<8x128xf32>
    %229 = arith.mulf %227, %228 : vector<8x128xf32>
    %230 = vector.broadcast %225 : vector<8x1xf32> to vector<8x128xf32>
    %231 = arith.addf %229, %230 : vector<8x128xf32>
    %cst_108 = arith.constant 0.000000e+00 : f32
    %232 = vector.broadcast %cst_108 : f32 to vector<8x128xf32>
    %233 = arith.maximumf %231, %232 : vector<8x128xf32>
    %234 = vector.broadcast %226 : vector<8x1xf32> to vector<8x128xf32>
    %235 = arith.mulf %233, %234 : vector<8x128xf32>
    %236 = arith.addf %223, %235 : vector<8x128xf32>
    %c144 = arith.constant 144 : index
    %c0_109 = arith.constant 0 : index
    %237 = vector.load %arg1[%c144, %c0_109] : memref<256x4xf32, #tpu.memory_space<vmem>>, vector<8x1xf32>
    %c144_110 = arith.constant 144 : index
    %c1_111 = arith.constant 1 : index
    %238 = vector.load %arg1[%c144_110, %c1_111] : memref<256x4xf32, #tpu.memory_space<vmem>>, vector<8x1xf32>
    %c144_112 = arith.constant 144 : index
    %c2_113 = arith.constant 2 : index
    %239 = vector.load %arg1[%c144_112, %c2_113] : memref<256x4xf32, #tpu.memory_space<vmem>>, vector<8x1xf32>
    %240 = vector.broadcast %237 : vector<8x1xf32> to vector<8x128xf32>
    %241 = vector.broadcast %1 : vector<1x128xf32> to vector<8x128xf32>
    %242 = arith.mulf %240, %241 : vector<8x128xf32>
    %243 = vector.broadcast %238 : vector<8x1xf32> to vector<8x128xf32>
    %244 = arith.addf %242, %243 : vector<8x128xf32>
    %cst_114 = arith.constant 0.000000e+00 : f32
    %245 = vector.broadcast %cst_114 : f32 to vector<8x128xf32>
    %246 = arith.maximumf %244, %245 : vector<8x128xf32>
    %247 = vector.broadcast %239 : vector<8x1xf32> to vector<8x128xf32>
    %248 = arith.mulf %246, %247 : vector<8x128xf32>
    %249 = arith.addf %236, %248 : vector<8x128xf32>
    %c152 = arith.constant 152 : index
    %c0_115 = arith.constant 0 : index
    %250 = vector.load %arg1[%c152, %c0_115] : memref<256x4xf32, #tpu.memory_space<vmem>>, vector<8x1xf32>
    %c152_116 = arith.constant 152 : index
    %c1_117 = arith.constant 1 : index
    %251 = vector.load %arg1[%c152_116, %c1_117] : memref<256x4xf32, #tpu.memory_space<vmem>>, vector<8x1xf32>
    %c152_118 = arith.constant 152 : index
    %c2_119 = arith.constant 2 : index
    %252 = vector.load %arg1[%c152_118, %c2_119] : memref<256x4xf32, #tpu.memory_space<vmem>>, vector<8x1xf32>
    %253 = vector.broadcast %250 : vector<8x1xf32> to vector<8x128xf32>
    %254 = vector.broadcast %1 : vector<1x128xf32> to vector<8x128xf32>
    %255 = arith.mulf %253, %254 : vector<8x128xf32>
    %256 = vector.broadcast %251 : vector<8x1xf32> to vector<8x128xf32>
    %257 = arith.addf %255, %256 : vector<8x128xf32>
    %cst_120 = arith.constant 0.000000e+00 : f32
    %258 = vector.broadcast %cst_120 : f32 to vector<8x128xf32>
    %259 = arith.maximumf %257, %258 : vector<8x128xf32>
    %260 = vector.broadcast %252 : vector<8x1xf32> to vector<8x128xf32>
    %261 = arith.mulf %259, %260 : vector<8x128xf32>
    %262 = arith.addf %249, %261 : vector<8x128xf32>
    %c160 = arith.constant 160 : index
    %c0_121 = arith.constant 0 : index
    %263 = vector.load %arg1[%c160, %c0_121] : memref<256x4xf32, #tpu.memory_space<vmem>>, vector<8x1xf32>
    %c160_122 = arith.constant 160 : index
    %c1_123 = arith.constant 1 : index
    %264 = vector.load %arg1[%c160_122, %c1_123] : memref<256x4xf32, #tpu.memory_space<vmem>>, vector<8x1xf32>
    %c160_124 = arith.constant 160 : index
    %c2_125 = arith.constant 2 : index
    %265 = vector.load %arg1[%c160_124, %c2_125] : memref<256x4xf32, #tpu.memory_space<vmem>>, vector<8x1xf32>
    %266 = vector.broadcast %263 : vector<8x1xf32> to vector<8x128xf32>
    %267 = vector.broadcast %1 : vector<1x128xf32> to vector<8x128xf32>
    %268 = arith.mulf %266, %267 : vector<8x128xf32>
    %269 = vector.broadcast %264 : vector<8x1xf32> to vector<8x128xf32>
    %270 = arith.addf %268, %269 : vector<8x128xf32>
    %cst_126 = arith.constant 0.000000e+00 : f32
    %271 = vector.broadcast %cst_126 : f32 to vector<8x128xf32>
    %272 = arith.maximumf %270, %271 : vector<8x128xf32>
    %273 = vector.broadcast %265 : vector<8x1xf32> to vector<8x128xf32>
    %274 = arith.mulf %272, %273 : vector<8x128xf32>
    %275 = arith.addf %262, %274 : vector<8x128xf32>
    %c168 = arith.constant 168 : index
    %c0_127 = arith.constant 0 : index
    %276 = vector.load %arg1[%c168, %c0_127] : memref<256x4xf32, #tpu.memory_space<vmem>>, vector<8x1xf32>
    %c168_128 = arith.constant 168 : index
    %c1_129 = arith.constant 1 : index
    %277 = vector.load %arg1[%c168_128, %c1_129] : memref<256x4xf32, #tpu.memory_space<vmem>>, vector<8x1xf32>
    %c168_130 = arith.constant 168 : index
    %c2_131 = arith.constant 2 : index
    %278 = vector.load %arg1[%c168_130, %c2_131] : memref<256x4xf32, #tpu.memory_space<vmem>>, vector<8x1xf32>
    %279 = vector.broadcast %276 : vector<8x1xf32> to vector<8x128xf32>
    %280 = vector.broadcast %1 : vector<1x128xf32> to vector<8x128xf32>
    %281 = arith.mulf %279, %280 : vector<8x128xf32>
    %282 = vector.broadcast %277 : vector<8x1xf32> to vector<8x128xf32>
    %283 = arith.addf %281, %282 : vector<8x128xf32>
    %cst_132 = arith.constant 0.000000e+00 : f32
    %284 = vector.broadcast %cst_132 : f32 to vector<8x128xf32>
    %285 = arith.maximumf %283, %284 : vector<8x128xf32>
    %286 = vector.broadcast %278 : vector<8x1xf32> to vector<8x128xf32>
    %287 = arith.mulf %285, %286 : vector<8x128xf32>
    %288 = arith.addf %275, %287 : vector<8x128xf32>
    %c176 = arith.constant 176 : index
    %c0_133 = arith.constant 0 : index
    %289 = vector.load %arg1[%c176, %c0_133] : memref<256x4xf32, #tpu.memory_space<vmem>>, vector<8x1xf32>
    %c176_134 = arith.constant 176 : index
    %c1_135 = arith.constant 1 : index
    %290 = vector.load %arg1[%c176_134, %c1_135] : memref<256x4xf32, #tpu.memory_space<vmem>>, vector<8x1xf32>
    %c176_136 = arith.constant 176 : index
    %c2_137 = arith.constant 2 : index
    %291 = vector.load %arg1[%c176_136, %c2_137] : memref<256x4xf32, #tpu.memory_space<vmem>>, vector<8x1xf32>
    %292 = vector.broadcast %289 : vector<8x1xf32> to vector<8x128xf32>
    %293 = vector.broadcast %1 : vector<1x128xf32> to vector<8x128xf32>
    %294 = arith.mulf %292, %293 : vector<8x128xf32>
    %295 = vector.broadcast %290 : vector<8x1xf32> to vector<8x128xf32>
    %296 = arith.addf %294, %295 : vector<8x128xf32>
    %cst_138 = arith.constant 0.000000e+00 : f32
    %297 = vector.broadcast %cst_138 : f32 to vector<8x128xf32>
    %298 = arith.maximumf %296, %297 : vector<8x128xf32>
    %299 = vector.broadcast %291 : vector<8x1xf32> to vector<8x128xf32>
    %300 = arith.mulf %298, %299 : vector<8x128xf32>
    %301 = arith.addf %288, %300 : vector<8x128xf32>
    %c184 = arith.constant 184 : index
    %c0_139 = arith.constant 0 : index
    %302 = vector.load %arg1[%c184, %c0_139] : memref<256x4xf32, #tpu.memory_space<vmem>>, vector<8x1xf32>
    %c184_140 = arith.constant 184 : index
    %c1_141 = arith.constant 1 : index
    %303 = vector.load %arg1[%c184_140, %c1_141] : memref<256x4xf32, #tpu.memory_space<vmem>>, vector<8x1xf32>
    %c184_142 = arith.constant 184 : index
    %c2_143 = arith.constant 2 : index
    %304 = vector.load %arg1[%c184_142, %c2_143] : memref<256x4xf32, #tpu.memory_space<vmem>>, vector<8x1xf32>
    %305 = vector.broadcast %302 : vector<8x1xf32> to vector<8x128xf32>
    %306 = vector.broadcast %1 : vector<1x128xf32> to vector<8x128xf32>
    %307 = arith.mulf %305, %306 : vector<8x128xf32>
    %308 = vector.broadcast %303 : vector<8x1xf32> to vector<8x128xf32>
    %309 = arith.addf %307, %308 : vector<8x128xf32>
    %cst_144 = arith.constant 0.000000e+00 : f32
    %310 = vector.broadcast %cst_144 : f32 to vector<8x128xf32>
    %311 = arith.maximumf %309, %310 : vector<8x128xf32>
    %312 = vector.broadcast %304 : vector<8x1xf32> to vector<8x128xf32>
    %313 = arith.mulf %311, %312 : vector<8x128xf32>
    %314 = arith.addf %301, %313 : vector<8x128xf32>
    %c192 = arith.constant 192 : index
    %c0_145 = arith.constant 0 : index
    %315 = vector.load %arg1[%c192, %c0_145] : memref<256x4xf32, #tpu.memory_space<vmem>>, vector<8x1xf32>
    %c192_146 = arith.constant 192 : index
    %c1_147 = arith.constant 1 : index
    %316 = vector.load %arg1[%c192_146, %c1_147] : memref<256x4xf32, #tpu.memory_space<vmem>>, vector<8x1xf32>
    %c192_148 = arith.constant 192 : index
    %c2_149 = arith.constant 2 : index
    %317 = vector.load %arg1[%c192_148, %c2_149] : memref<256x4xf32, #tpu.memory_space<vmem>>, vector<8x1xf32>
    %318 = vector.broadcast %315 : vector<8x1xf32> to vector<8x128xf32>
    %319 = vector.broadcast %1 : vector<1x128xf32> to vector<8x128xf32>
    %320 = arith.mulf %318, %319 : vector<8x128xf32>
    %321 = vector.broadcast %316 : vector<8x1xf32> to vector<8x128xf32>
    %322 = arith.addf %320, %321 : vector<8x128xf32>
    %cst_150 = arith.constant 0.000000e+00 : f32
    %323 = vector.broadcast %cst_150 : f32 to vector<8x128xf32>
    %324 = arith.maximumf %322, %323 : vector<8x128xf32>
    %325 = vector.broadcast %317 : vector<8x1xf32> to vector<8x128xf32>
    %326 = arith.mulf %324, %325 : vector<8x128xf32>
    %327 = arith.addf %314, %326 : vector<8x128xf32>
    %c200 = arith.constant 200 : index
    %c0_151 = arith.constant 0 : index
    %328 = vector.load %arg1[%c200, %c0_151] : memref<256x4xf32, #tpu.memory_space<vmem>>, vector<8x1xf32>
    %c200_152 = arith.constant 200 : index
    %c1_153 = arith.constant 1 : index
    %329 = vector.load %arg1[%c200_152, %c1_153] : memref<256x4xf32, #tpu.memory_space<vmem>>, vector<8x1xf32>
    %c200_154 = arith.constant 200 : index
    %c2_155 = arith.constant 2 : index
    %330 = vector.load %arg1[%c200_154, %c2_155] : memref<256x4xf32, #tpu.memory_space<vmem>>, vector<8x1xf32>
    %331 = vector.broadcast %328 : vector<8x1xf32> to vector<8x128xf32>
    %332 = vector.broadcast %1 : vector<1x128xf32> to vector<8x128xf32>
    %333 = arith.mulf %331, %332 : vector<8x128xf32>
    %334 = vector.broadcast %329 : vector<8x1xf32> to vector<8x128xf32>
    %335 = arith.addf %333, %334 : vector<8x128xf32>
    %cst_156 = arith.constant 0.000000e+00 : f32
    %336 = vector.broadcast %cst_156 : f32 to vector<8x128xf32>
    %337 = arith.maximumf %335, %336 : vector<8x128xf32>
    %338 = vector.broadcast %330 : vector<8x1xf32> to vector<8x128xf32>
    %339 = arith.mulf %337, %338 : vector<8x128xf32>
    %340 = arith.addf %327, %339 : vector<8x128xf32>
    %c208 = arith.constant 208 : index
    %c0_157 = arith.constant 0 : index
    %341 = vector.load %arg1[%c208, %c0_157] : memref<256x4xf32, #tpu.memory_space<vmem>>, vector<8x1xf32>
    %c208_158 = arith.constant 208 : index
    %c1_159 = arith.constant 1 : index
    %342 = vector.load %arg1[%c208_158, %c1_159] : memref<256x4xf32, #tpu.memory_space<vmem>>, vector<8x1xf32>
    %c208_160 = arith.constant 208 : index
    %c2_161 = arith.constant 2 : index
    %343 = vector.load %arg1[%c208_160, %c2_161] : memref<256x4xf32, #tpu.memory_space<vmem>>, vector<8x1xf32>
    %344 = vector.broadcast %341 : vector<8x1xf32> to vector<8x128xf32>
    %345 = vector.broadcast %1 : vector<1x128xf32> to vector<8x128xf32>
    %346 = arith.mulf %344, %345 : vector<8x128xf32>
    %347 = vector.broadcast %342 : vector<8x1xf32> to vector<8x128xf32>
    %348 = arith.addf %346, %347 : vector<8x128xf32>
    %cst_162 = arith.constant 0.000000e+00 : f32
    %349 = vector.broadcast %cst_162 : f32 to vector<8x128xf32>
    %350 = arith.maximumf %348, %349 : vector<8x128xf32>
    %351 = vector.broadcast %343 : vector<8x1xf32> to vector<8x128xf32>
    %352 = arith.mulf %350, %351 : vector<8x128xf32>
    %353 = arith.addf %340, %352 : vector<8x128xf32>
    %c216 = arith.constant 216 : index
    %c0_163 = arith.constant 0 : index
    %354 = vector.load %arg1[%c216, %c0_163] : memref<256x4xf32, #tpu.memory_space<vmem>>, vector<8x1xf32>
    %c216_164 = arith.constant 216 : index
    %c1_165 = arith.constant 1 : index
    %355 = vector.load %arg1[%c216_164, %c1_165] : memref<256x4xf32, #tpu.memory_space<vmem>>, vector<8x1xf32>
    %c216_166 = arith.constant 216 : index
    %c2_167 = arith.constant 2 : index
    %356 = vector.load %arg1[%c216_166, %c2_167] : memref<256x4xf32, #tpu.memory_space<vmem>>, vector<8x1xf32>
    %357 = vector.broadcast %354 : vector<8x1xf32> to vector<8x128xf32>
    %358 = vector.broadcast %1 : vector<1x128xf32> to vector<8x128xf32>
    %359 = arith.mulf %357, %358 : vector<8x128xf32>
    %360 = vector.broadcast %355 : vector<8x1xf32> to vector<8x128xf32>
    %361 = arith.addf %359, %360 : vector<8x128xf32>
    %cst_168 = arith.constant 0.000000e+00 : f32
    %362 = vector.broadcast %cst_168 : f32 to vector<8x128xf32>
    %363 = arith.maximumf %361, %362 : vector<8x128xf32>
    %364 = vector.broadcast %356 : vector<8x1xf32> to vector<8x128xf32>
    %365 = arith.mulf %363, %364 : vector<8x128xf32>
    %366 = arith.addf %353, %365 : vector<8x128xf32>
    %c224 = arith.constant 224 : index
    %c0_169 = arith.constant 0 : index
    %367 = vector.load %arg1[%c224, %c0_169] : memref<256x4xf32, #tpu.memory_space<vmem>>, vector<8x1xf32>
    %c224_170 = arith.constant 224 : index
    %c1_171 = arith.constant 1 : index
    %368 = vector.load %arg1[%c224_170, %c1_171] : memref<256x4xf32, #tpu.memory_space<vmem>>, vector<8x1xf32>
    %c224_172 = arith.constant 224 : index
    %c2_173 = arith.constant 2 : index
    %369 = vector.load %arg1[%c224_172, %c2_173] : memref<256x4xf32, #tpu.memory_space<vmem>>, vector<8x1xf32>
    %370 = vector.broadcast %367 : vector<8x1xf32> to vector<8x128xf32>
    %371 = vector.broadcast %1 : vector<1x128xf32> to vector<8x128xf32>
    %372 = arith.mulf %370, %371 : vector<8x128xf32>
    %373 = vector.broadcast %368 : vector<8x1xf32> to vector<8x128xf32>
    %374 = arith.addf %372, %373 : vector<8x128xf32>
    %cst_174 = arith.constant 0.000000e+00 : f32
    %375 = vector.broadcast %cst_174 : f32 to vector<8x128xf32>
    %376 = arith.maximumf %374, %375 : vector<8x128xf32>
    %377 = vector.broadcast %369 : vector<8x1xf32> to vector<8x128xf32>
    %378 = arith.mulf %376, %377 : vector<8x128xf32>
    %379 = arith.addf %366, %378 : vector<8x128xf32>
    %c232 = arith.constant 232 : index
    %c0_175 = arith.constant 0 : index
    %380 = vector.load %arg1[%c232, %c0_175] : memref<256x4xf32, #tpu.memory_space<vmem>>, vector<8x1xf32>
    %c232_176 = arith.constant 232 : index
    %c1_177 = arith.constant 1 : index
    %381 = vector.load %arg1[%c232_176, %c1_177] : memref<256x4xf32, #tpu.memory_space<vmem>>, vector<8x1xf32>
    %c232_178 = arith.constant 232 : index
    %c2_179 = arith.constant 2 : index
    %382 = vector.load %arg1[%c232_178, %c2_179] : memref<256x4xf32, #tpu.memory_space<vmem>>, vector<8x1xf32>
    %383 = vector.broadcast %380 : vector<8x1xf32> to vector<8x128xf32>
    %384 = vector.broadcast %1 : vector<1x128xf32> to vector<8x128xf32>
    %385 = arith.mulf %383, %384 : vector<8x128xf32>
    %386 = vector.broadcast %381 : vector<8x1xf32> to vector<8x128xf32>
    %387 = arith.addf %385, %386 : vector<8x128xf32>
    %cst_180 = arith.constant 0.000000e+00 : f32
    %388 = vector.broadcast %cst_180 : f32 to vector<8x128xf32>
    %389 = arith.maximumf %387, %388 : vector<8x128xf32>
    %390 = vector.broadcast %382 : vector<8x1xf32> to vector<8x128xf32>
    %391 = arith.mulf %389, %390 : vector<8x128xf32>
    %392 = arith.addf %379, %391 : vector<8x128xf32>
    %c240 = arith.constant 240 : index
    %c0_181 = arith.constant 0 : index
    %393 = vector.load %arg1[%c240, %c0_181] : memref<256x4xf32, #tpu.memory_space<vmem>>, vector<8x1xf32>
    %c240_182 = arith.constant 240 : index
    %c1_183 = arith.constant 1 : index
    %394 = vector.load %arg1[%c240_182, %c1_183] : memref<256x4xf32, #tpu.memory_space<vmem>>, vector<8x1xf32>
    %c240_184 = arith.constant 240 : index
    %c2_185 = arith.constant 2 : index
    %395 = vector.load %arg1[%c240_184, %c2_185] : memref<256x4xf32, #tpu.memory_space<vmem>>, vector<8x1xf32>
    %396 = vector.broadcast %393 : vector<8x1xf32> to vector<8x128xf32>
    %397 = vector.broadcast %1 : vector<1x128xf32> to vector<8x128xf32>
    %398 = arith.mulf %396, %397 : vector<8x128xf32>
    %399 = vector.broadcast %394 : vector<8x1xf32> to vector<8x128xf32>
    %400 = arith.addf %398, %399 : vector<8x128xf32>
    %cst_186 = arith.constant 0.000000e+00 : f32
    %401 = vector.broadcast %cst_186 : f32 to vector<8x128xf32>
    %402 = arith.maximumf %400, %401 : vector<8x128xf32>
    %403 = vector.broadcast %395 : vector<8x1xf32> to vector<8x128xf32>
    %404 = arith.mulf %402, %403 : vector<8x128xf32>
    %405 = arith.addf %392, %404 : vector<8x128xf32>
    %c248 = arith.constant 248 : index
    %c0_187 = arith.constant 0 : index
    %406 = vector.load %arg1[%c248, %c0_187] : memref<256x4xf32, #tpu.memory_space<vmem>>, vector<8x1xf32>
    %c248_188 = arith.constant 248 : index
    %c1_189 = arith.constant 1 : index
    %407 = vector.load %arg1[%c248_188, %c1_189] : memref<256x4xf32, #tpu.memory_space<vmem>>, vector<8x1xf32>
    %c248_190 = arith.constant 248 : index
    %c2_191 = arith.constant 2 : index
    %408 = vector.load %arg1[%c248_190, %c2_191] : memref<256x4xf32, #tpu.memory_space<vmem>>, vector<8x1xf32>
    %409 = vector.broadcast %406 : vector<8x1xf32> to vector<8x128xf32>
    %410 = vector.broadcast %1 : vector<1x128xf32> to vector<8x128xf32>
    %411 = arith.mulf %409, %410 : vector<8x128xf32>
    %412 = vector.broadcast %407 : vector<8x1xf32> to vector<8x128xf32>
    %413 = arith.addf %411, %412 : vector<8x128xf32>
    %cst_192 = arith.constant 0.000000e+00 : f32
    %414 = vector.broadcast %cst_192 : f32 to vector<8x128xf32>
    %415 = arith.maximumf %413, %414 : vector<8x128xf32>
    %416 = vector.broadcast %408 : vector<8x1xf32> to vector<8x128xf32>
    %417 = arith.mulf %415, %416 : vector<8x128xf32>
    %418 = arith.addf %405, %417 : vector<8x128xf32>
    %cst_193 = arith.constant dense<0.000000e+00> : vector<128xf32>
    %419 = vector.multi_reduction <add>, %418, %cst_193 [0] : vector<8x128xf32> to vector<128xf32>
    %420 = vector.shape_cast %419 : vector<128xf32> to vector<1x128xf32>
    %421 = vector.broadcast %0 : vector<1x1xf32> to vector<1x128xf32>
    %422 = arith.addf %420, %421 : vector<1x128xf32>
    %423 = arith.negf %422 : vector<1x128xf32>
    %424 = math.exp %423 : vector<1x128xf32>
    %cst_194 = arith.constant 1.000000e+00 : f32
    %425 = vector.broadcast %cst_194 : f32 to vector<1x128xf32>
    %426 = arith.addf %425, %424 : vector<1x128xf32>
    %427 = arith.divf %425, %426 : vector<1x128xf32>
    %c0_195 = arith.constant 0 : index
    %c0_196 = arith.constant 0 : index
    %428 = vector.load %arg3[%c0_195, %c0_196] : memref<1x128xf32, #tpu.memory_space<vmem>>, vector<1x128xf32>
    tpu.vector_store %arg3[%c0_195, %c0_196], %427 {strides = array<i32>} : memref<1x128xf32, #tpu.memory_space<vmem>>, vector<1x128xf32>,
    return
  }
  func.func @transform_0(%arg0: i32) -> (i32, i32) {
    %c0_i32 = arith.constant 0 : i32
    %c0_i32_0 = arith.constant 0 : i32
    %c0_i32_1 = arith.constant 0 : i32
    return %c0_i32, %c0_i32_0 : i32, i32
  }
  func.func @transform_1(%arg0: i32) -> (i32, i32) {
    %c0_i32 = arith.constant 0 : i32
    %c0_i32_0 = arith.constant 0 : i32
    return %c0_i32, %arg0 : i32, i32
  }
  func.func @transform_2(%arg0: i32) -> (i32, i32) {
    %c0_i32 = arith.constant 0 : i32
    %c0_i32_0 = arith.constant 0 : i32
    return %c0_i32, %arg0 : i32, i32
  }
}

</mosaic_0001>

<llo_original>
// kernel: tpu_custom_call.1
$region0: #{tpu_custom_call.1}
  #allocation0 [shape = 'u32[]', space=smem, size = 0x4, offset = 0x4, fixed_abs, tag = 'smem constant byte address 0x4 - core index']
  #allocation1 [shape = 'u32[144,128]{1,0:T(1,128)}', space=vmem, size = 0x12000, scoped, tag = 'internal scratch']
  %s0 = inlined_call_operand.vmem [shape: f32[256,4], index: 0, kind: input, shape index: {}]
  %s1 = inlined_call_operand.vmem [shape: f32[1,128], index: 1, kind: input, shape index: {}]
  %s2 = inlined_call_operand.hbm [shape: f32[1,128], index: 2, kind: output, shape index: {}]
  %s3 = sld [smem:[#allocation0]]
  $region18: #{tpu_custom_call.1} parent=0
    _
  %s5 = ssub.s32 1, %s3
  %s6 = scalar_select 0, %s5, %s3
  $region1: #{tpu_custom_call.1} parent=0
    #allocation2 [shape = 'u8[512]{0}', space=vmem, size = 0x400, scoped, tag = 'output window, operand 0, single buffered']
    #allocation3 [shape = 's32[1]{0}', space=sflag, size = 0x4, scoped, tag = 'scoped memory for tpu_custom_call.1']
    %7 = vsyncpa [#allocation3], 0
    // Predicated region
    $region2: #{tpu_custom_call.1} parent=1 // pred_check
      _
    $region3: #{tpu_custom_call.1} parent=1 // pred_check_branch
      %9 = sbr.rel (0) target = $region5
    $region4: #{tpu_custom_call.1} parent=1 // pred_region
      _
    $region5: #{tpu_custom_call.1} parent=1 // pred_fallthru
      _
    // Predicated region
    $region6: #{tpu_custom_call.1} parent=1 // pred_check
      _
    $region7: #{tpu_custom_call.1} parent=1 // pred_check_branch
      %11 = sbr.rel (0) target = $region9
    $region8: #{tpu_custom_call.1} parent=1 // pred_region
      _
    $region9: #{tpu_custom_call.1} parent=1 // pred_fallthru
      _
    %v12 = vld [vmem:[%s0] sm:$0x1]
    %v13 = vld [vmem:[%s1] sm:$0x1]
    %v14 = vld [vmem:[%s0] sm:$0xff]
    %16 = vset.pattern.permute.xlu0 0
    %17 = vperm.xlu0 %16, %v14
    %v18 = vpop.permute.xlu0 %17
    %v21 = vlaneseq
    %v22 = vshrl.u32 %v21, 7
    %v23 = vsub.s32 0, %v22
    %v24 = vrot.slane %v13, %v23
    %v26 = vmul.f32 %v18, %v24
    %27 = vset.pattern.permute.xlu0 1
    %28 = vperm.xlu0 %27, %v14
    %v29 = vpop.permute.xlu0 %28
    %v31 = vadd.f32 %v26, %v29
    %v32 = vmax.f32 %v31, 0.0
    %33 = vset.pattern.permute.xlu0 2
    %34 = vperm.xlu0 %33, %v14
    %v35 = vpop.permute.xlu0 %34
    %v37 = vmul.f32 %v32, %v35
    %v38 = vadd.f32 %v37, 0.0
    %v39 = vld [vmem:[%s0 + $0x8] sm:$0xff]
    %41 = vset.pattern.permute.xlu0 0
    %42 = vperm.xlu0 %41, %v39
    %v43 = vpop.permute.xlu0 %42
    %v45 = vmul.f32 %v43, %v24
    %46 = vset.pattern.permute.xlu0 1
    %47 = vperm.xlu0 %46, %v39
    %v48 = vpop.permute.xlu0 %47
    %v50 = vadd.f32 %v45, %v48
    %v51 = vmax.f32 %v50, 0.0
    %52 = vset.pattern.permute.xlu0 2
    %53 = vperm.xlu0 %52, %v39
    %v54 = vpop.permute.xlu0 %53
    %v56 = vmul.f32 %v51, %v54
    %v57 = vadd.f32 %v38, %v56
    %v58 = vld [vmem:[%s0 + $0x10] sm:$0xff]
    %60 = vset.pattern.permute.xlu0 0
    %61 = vperm.xlu0 %60, %v58
    %v62 = vpop.permute.xlu0 %61
    %v64 = vmul.f32 %v62, %v24
    %65 = vset.pattern.permute.xlu0 1
    %66 = vperm.xlu0 %65, %v58
    %v67 = vpop.permute.xlu0 %66
    %v69 = vadd.f32 %v64, %v67
    %v70 = vmax.f32 %v69, 0.0
    %71 = vset.pattern.permute.xlu0 2
    %72 = vperm.xlu0 %71, %v58
    %v73 = vpop.permute.xlu0 %72
    %v75 = vmul.f32 %v70, %v73
    %v76 = vadd.f32 %v57, %v75
    %v77 = vld [vmem:[%s0 + $0x18] sm:$0xff]
    %79 = vset.pattern.permute.xlu0 0
    %80 = vperm.xlu0 %79, %v77
    %v81 = vpop.permute.xlu0 %80
    %v83 = vmul.f32 %v81, %v24
    %84 = vset.pattern.permute.xlu0 1
    %85 = vperm.xlu0 %84, %v77
    %v86 = vpop.permute.xlu0 %85
    %v88 = vadd.f32 %v83, %v86
    %v89 = vmax.f32 %v88, 0.0
    %90 = vset.pattern.permute.xlu0 2
    %91 = vperm.xlu0 %90, %v77
    %v92 = vpop.permute.xlu0 %91
    %v94 = vmul.f32 %v89, %v92
    %v95 = vadd.f32 %v76, %v94
    %v96 = vld [vmem:[%s0 + $0x20] sm:$0xff]
    %98 = vset.pattern.permute.xlu0 0
    %99 = vperm.xlu0 %98, %v96
    %v100 = vpop.permute.xlu0 %99
    %v102 = vmul.f32 %v100, %v24
    %103 = vset.pattern.permute.xlu0 1
    %104 = vperm.xlu0 %103, %v96
    %v105 = vpop.permute.xlu0 %104
    %v107 = vadd.f32 %v102, %v105
    %v108 = vmax.f32 %v107, 0.0
    %109 = vset.pattern.permute.xlu0 2
    %110 = vperm.xlu0 %109, %v96
    %v111 = vpop.permute.xlu0 %110
    %v113 = vmul.f32 %v108, %v111
    %v114 = vadd.f32 %v95, %v113
    %v115 = vld [vmem:[%s0 + $0x28] sm:$0xff]
    %117 = vset.pattern.permute.xlu0 0
    %118 = vperm.xlu0 %117, %v115
    %v119 = vpop.permute.xlu0 %118
    %v121 = vmul.f32 %v119, %v24
    %122 = vset.pattern.permute.xlu0 1
    %123 = vperm.xlu0 %122, %v115
    %v124 = vpop.permute.xlu0 %123
    %v126 = vadd.f32 %v121, %v124
    %v127 = vmax.f32 %v126, 0.0
    %128 = vset.pattern.permute.xlu0 2
    %129 = vperm.xlu0 %128, %v115
    %v130 = vpop.permute.xlu0 %129
    %v132 = vmul.f32 %v127, %v130
    %v133 = vadd.f32 %v114, %v132
    %v134 = vld [vmem:[%s0 + $0x30] sm:$0xff]
    %136 = vset.pattern.permute.xlu0 0
    %137 = vperm.xlu0 %136, %v134
    %v138 = vpop.permute.xlu0 %137
    %v140 = vmul.f32 %v138, %v24
    %141 = vset.pattern.permute.xlu0 1
    %142 = vperm.xlu0 %141, %v134
    %v143 = vpop.permute.xlu0 %142
    %v145 = vadd.f32 %v140, %v143
    %v146 = vmax.f32 %v145, 0.0
    %147 = vset.pattern.permute.xlu0 2
    %148 = vperm.xlu0 %147, %v134
    %v149 = vpop.permute.xlu0 %148
    %v151 = vmul.f32 %v146, %v149
    %v152 = vadd.f32 %v133, %v151
    %v153 = vld [vmem:[%s0 + $0x38] sm:$0xff]
    %155 = vset.pattern.permute.xlu0 0
    %156 = vperm.xlu0 %155, %v153
    %v157 = vpop.permute.xlu0 %156
    %v159 = vmul.f32 %v157, %v24
    %160 = vset.pattern.permute.xlu0 1
    %161 = vperm.xlu0 %160, %v153
    %v162 = vpop.permute.xlu0 %161
    %v164 = vadd.f32 %v159, %v162
    %v165 = vmax.f32 %v164, 0.0
    %166 = vset.pattern.permute.xlu0 2
    %167 = vperm.xlu0 %166, %v153
    %v168 = vpop.permute.xlu0 %167
    %v170 = vmul.f32 %v165, %v168
    %v171 = vadd.f32 %v152, %v170
    %v172 = vld [vmem:[%s0 + $0x40] sm:$0xff]
    %174 = vset.pattern.permute.xlu0 0
    %175 = vperm.xlu0 %174, %v172
    %v176 = vpop.permute.xlu0 %175
    %v178 = vmul.f32 %v176, %v24
    %179 = vset.pattern.permute.xlu0 1
    %180 = vperm.xlu0 %179, %v172
    %v181 = vpop.permute.xlu0 %180
    %v183 = vadd.f32 %v178, %v181
    %v184 = vmax.f32 %v183, 0.0
    %185 = vset.pattern.permute.xlu0 2
    %186 = vperm.xlu0 %185, %v172
    %v187 = vpop.permute.xlu0 %186
    %v189 = vmul.f32 %v184, %v187
    %v190 = vadd.f32 %v171, %v189
    %v191 = vld [vmem:[%s0 + $0x48] sm:$0xff]
    %193 = vset.pattern.permute.xlu0 0
    %194 = vperm.xlu0 %193, %v191
    %v195 = vpop.permute.xlu0 %194
    %v197 = vmul.f32 %v195, %v24
    %198 = vset.pattern.permute.xlu0 1
    %199 = vperm.xlu0 %198, %v191
    %v200 = vpop.permute.xlu0 %199
    %v202 = vadd.f32 %v197, %v200
    %v203 = vmax.f32 %v202, 0.0
    %204 = vset.pattern.permute.xlu0 2
    %205 = vperm.xlu0 %204, %v191
    %v206 = vpop.permute.xlu0 %205
    %v208 = vmul.f32 %v203, %v206
    %v209 = vadd.f32 %v190, %v208
    %v210 = vld [vmem:[%s0 + $0x50] sm:$0xff]
    %212 = vset.pattern.permute.xlu0 0
    %213 = vperm.xlu0 %212, %v210
    %v214 = vpop.permute.xlu0 %213
    %v216 = vmul.f32 %v214, %v24
    %217 = vset.pattern.permute.xlu0 1
    %218 = vperm.xlu0 %217, %v210
    %v219 = vpop.permute.xlu0 %218
    %v221 = vadd.f32 %v216, %v219
    %v222 = vmax.f32 %v221, 0.0
    %223 = vset.pattern.permute.xlu0 2
    %224 = vperm.xlu0 %223, %v210
    %v225 = vpop.permute.xlu0 %224
    %v227 = vmul.f32 %v222, %v225
    %v228 = vadd.f32 %v209, %v227
    %v229 = vld [vmem:[%s0 + $0x58] sm:$0xff]
    %231 = vset.pattern.permute.xlu0 0
    %232 = vperm.xlu0 %231, %v229
    %v233 = vpop.permute.xlu0 %232
    %v235 = vmul.f32 %v233, %v24
    %236 = vset.pattern.permute.xlu0 1
    %237 = vperm.xlu0 %236, %v229
    %v238 = vpop.permute.xlu0 %237
    %v240 = vadd.f32 %v235, %v238
    %v241 = vmax.f32 %v240, 0.0
    %242 = vset.pattern.permute.xlu0 2
    %243 = vperm.xlu0 %242, %v229
    %v244 = vpop.permute.xlu0 %243
    %v246 = vmul.f32 %v241, %v244
    %v247 = vadd.f32 %v228, %v246
    %v248 = vld [vmem:[%s0 + $0x60] sm:$0xff]
    %250 = vset.pattern.permute.xlu0 0
    %251 = vperm.xlu0 %250, %v248
    %v252 = vpop.permute.xlu0 %251
    %v254 = vmul.f32 %v252, %v24
    %255 = vset.pattern.permute.xlu0 1
    %256 = vperm.xlu0 %255, %v248
    %v257 = vpop.permute.xlu0 %256
    %v259 = vadd.f32 %v254, %v257
    %v260 = vmax.f32 %v259, 0.0
    %261 = vset.pattern.permute.xlu0 2
    %262 = vperm.xlu0 %261, %v248
    %v263 = vpop.permute.xlu0 %262
    %v265 = vmul.f32 %v260, %v263
    %v266 = vadd.f32 %v247, %v265
    %v267 = vld [vmem:[%s0 + $0x68] sm:$0xff]
    %269 = vset.pattern.permute.xlu0 0
    %270 = vperm.xlu0 %269, %v267
    %v271 = vpop.permute.xlu0 %270
    %v273 = vmul.f32 %v271, %v24
    %274 = vset.pattern.permute.xlu0 1
    %275 = vperm.xlu0 %274, %v267
    %v276 = vpop.permute.xlu0 %275
    %v278 = vadd.f32 %v273, %v276
    %v279 = vmax.f32 %v278, 0.0
    %280 = vset.pattern.permute.xlu0 2
    %281 = vperm.xlu0 %280, %v267
    %v282 = vpop.permute.xlu0 %281
    %v284 = vmul.f32 %v279, %v282
    %v285 = vadd.f32 %v266, %v284
    %v286 = vld [vmem:[%s0 + $0x70] sm:$0xff]
    %288 = vset.pattern.permute.xlu0 0
    %289 = vperm.xlu0 %288, %v286
    %v290 = vpop.permute.xlu0 %289
    %v292 = vmul.f32 %v290, %v24
    %293 = vset.pattern.permute.xlu0 1
    %294 = vperm.xlu0 %293, %v286
    %v295 = vpop.permute.xlu0 %294
    %v297 = vadd.f32 %v292, %v295
    %v298 = vmax.f32 %v297, 0.0
    %299 = vset.pattern.permute.xlu0 2
    %300 = vperm.xlu0 %299, %v286
    %v301 = vpop.permute.xlu0 %300
    %v303 = vmul.f32 %v298, %v301
    %v304 = vadd.f32 %v285, %v303
    %v305 = vld [vmem:[%s0 + $0x78] sm:$0xff]
    %307 = vset.pattern.permute.xlu0 0
    %308 = vperm.xlu0 %307, %v305
    %v309 = vpop.permute.xlu0 %308
    %v311 = vmul.f32 %v309, %v24
    %312 = vset.pattern.permute.xlu0 1
    %313 = vperm.xlu0 %312, %v305
    %v314 = vpop.permute.xlu0 %313
    %v316 = vadd.f32 %v311, %v314
    %v317 = vmax.f32 %v316, 0.0
    %318 = vset.pattern.permute.xlu0 2
    %319 = vperm.xlu0 %318, %v305
    %v320 = vpop.permute.xlu0 %319
    %v322 = vmul.f32 %v317, %v320
    %v323 = vadd.f32 %v304, %v322
    %v324 = vld [vmem:[%s0 + $0x80] sm:$0xff]
    %326 = vset.pattern.permute.xlu0 0
    %327 = vperm.xlu0 %326, %v324
    %v328 = vpop.permute.xlu0 %327
    %v330 = vmul.f32 %v328, %v24
    %331 = vset.pattern.permute.xlu0 1
    %332 = vperm.xlu0 %331, %v324
    %v333 = vpop.permute.xlu0 %332
    %v335 = vadd.f32 %v330, %v333
    %v336 = vmax.f32 %v335, 0.0
    %337 = vset.pattern.permute.xlu0 2
    %338 = vperm.xlu0 %337, %v324
    %v339 = vpop.permute.xlu0 %338
    %v341 = vmul.f32 %v336, %v339
    %v342 = vadd.f32 %v323, %v341
    %v343 = vld [vmem:[%s0 + $0x88] sm:$0xff]
    %345 = vset.pattern.permute.xlu0 0
    %346 = vperm.xlu0 %345, %v343
    %v347 = vpop.permute.xlu0 %346
    %v349 = vmul.f32 %v347, %v24
    %350 = vset.pattern.permute.xlu0 1
    %351 = vperm.xlu0 %350, %v343
    %v352 = vpop.permute.xlu0 %351
    %v354 = vadd.f32 %v349, %v352
    %v355 = vmax.f32 %v354, 0.0
    %356 = vset.pattern.permute.xlu0 2
    %357 = vperm.xlu0 %356, %v343
    %v358 = vpop.permute.xlu0 %357
    %v360 = vmul.f32 %v355, %v358
    %v361 = vadd.f32 %v342, %v360
    %v362 = vld [vmem:[%s0 + $0x90] sm:$0xff]
    %364 = vset.pattern.permute.xlu0 0
    %365 = vperm.xlu0 %364, %v362
    %v366 = vpop.permute.xlu0 %365
    %v368 = vmul.f32 %v366, %v24
    %369 = vset.pattern.permute.xlu0 1
    %370 = vperm.xlu0 %369, %v362
    %v371 = vpop.permute.xlu0 %370
    %v373 = vadd.f32 %v368, %v371
    %v374 = vmax.f32 %v373, 0.0
    %375 = vset.pattern.permute.xlu0 2
    %376 = vperm.xlu0 %375, %v362
    %v377 = vpop.permute.xlu0 %376
    %v379 = vmul.f32 %v374, %v377
    %v380 = vadd.f32 %v361, %v379
    %v381 = vld [vmem:[%s0 + $0x98] sm:$0xff]
    %383 = vset.pattern.permute.xlu0 0
    %384 = vperm.xlu0 %383, %v381
    %v385 = vpop.permute.xlu0 %384
    %v387 = vmul.f32 %v385, %v24
    %388 = vset.pattern.permute.xlu0 1
    %389 = vperm.xlu0 %388, %v381
    %v390 = vpop.permute.xlu0 %389
    %v392 = vadd.f32 %v387, %v390
    %v393 = vmax.f32 %v392, 0.0
    %394 = vset.pattern.permute.xlu0 2
    %395 = vperm.xlu0 %394, %v381
    %v396 = vpop.permute.xlu0 %395
    %v398 = vmul.f32 %v393, %v396
    %v399 = vadd.f32 %v380, %v398
    %v400 = vld [vmem:[%s0 + $0xa0] sm:$0xff]
    %402 = vset.pattern.permute.xlu0 0
    %403 = vperm.xlu0 %402, %v400
    %v404 = vpop.permute.xlu0 %403
    %v406 = vmul.f32 %v404, %v24
    %407 = vset.pattern.permute.xlu0 1
    %408 = vperm.xlu0 %407, %v400
    %v409 = vpop.permute.xlu0 %408
    %v411 = vadd.f32 %v406, %v409
    %v412 = vmax.f32 %v411, 0.0
    %413 = vset.pattern.permute.xlu0 2
    %414 = vperm.xlu0 %413, %v400
    %v415 = vpop.permute.xlu0 %414
    %v417 = vmul.f32 %v412, %v415
    %v418 = vadd.f32 %v399, %v417
    %v419 = vld [vmem:[%s0 + $0xa8] sm:$0xff]
    %421 = vset.pattern.permute.xlu0 0
    %422 = vperm.xlu0 %421, %v419
    %v423 = vpop.permute.xlu0 %422
    %v425 = vmul.f32 %v423, %v24
    %426 = vset.pattern.permute.xlu0 1
    %427 = vperm.xlu0 %426, %v419
    %v428 = vpop.permute.xlu0 %427
    %v430 = vadd.f32 %v425, %v428
    %v431 = vmax.f32 %v430, 0.0
    %432 = vset.pattern.permute.xlu0 2
    %433 = vperm.xlu0 %432, %v419
    %v434 = vpop.permute.xlu0 %433
    %v436 = vmul.f32 %v431, %v434
    %v437 = vadd.f32 %v418, %v436
    %v438 = vld [vmem:[%s0 + $0xb0] sm:$0xff]
    %440 = vset.pattern.permute.xlu0 0
    %441 = vperm.xlu0 %440, %v438
    %v442 = vpop.permute.xlu0 %441
    %v444 = vmul.f32 %v442, %v24
    %445 = vset.pattern.permute.xlu0 1
    %446 = vperm.xlu0 %445, %v438
    %v447 = vpop.permute.xlu0 %446
    %v449 = vadd.f32 %v444, %v447
    %v450 = vmax.f32 %v449, 0.0
    %451 = vset.pattern.permute.xlu0 2
    %452 = vperm.xlu0 %451, %v438
    %v453 = vpop.permute.xlu0 %452
    %v455 = vmul.f32 %v450, %v453
    %v456 = vadd.f32 %v437, %v455
    %v457 = vld [vmem:[%s0 + $0xb8] sm:$0xff]
    %459 = vset.pattern.permute.xlu0 0
    %460 = vperm.xlu0 %459, %v457
    %v461 = vpop.permute.xlu0 %460
    %v463 = vmul.f32 %v461, %v24
    %464 = vset.pattern.permute.xlu0 1
    %465 = vperm.xlu0 %464, %v457
    %v466 = vpop.permute.xlu0 %465
    %v468 = vadd.f32 %v463, %v466
    %v469 = vmax.f32 %v468, 0.0
    %470 = vset.pattern.permute.xlu0 2
    %471 = vperm.xlu0 %470, %v457
    %v472 = vpop.permute.xlu0 %471
    %v474 = vmul.f32 %v469, %v472
    %v475 = vadd.f32 %v456, %v474
    %v476 = vld [vmem:[%s0 + $0xc0] sm:$0xff]
    %478 = vset.pattern.permute.xlu0 0
    %479 = vperm.xlu0 %478, %v476
    %v480 = vpop.permute.xlu0 %479
    %v482 = vmul.f32 %v480, %v24
    %483 = vset.pattern.permute.xlu0 1
    %484 = vperm.xlu0 %483, %v476
    %v485 = vpop.permute.xlu0 %484
    %v487 = vadd.f32 %v482, %v485
    %v488 = vmax.f32 %v487, 0.0
    %489 = vset.pattern.permute.xlu0 2
    %490 = vperm.xlu0 %489, %v476
    %v491 = vpop.permute.xlu0 %490
    %v493 = vmul.f32 %v488, %v491
    %v494 = vadd.f32 %v475, %v493
    %v495 = vld [vmem:[%s0 + $0xc8] sm:$0xff]
    %497 = vset.pattern.permute.xlu0 0
    %498 = vperm.xlu0 %497, %v495
    %v499 = vpop.permute.xlu0 %498
    %v501 = vmul.f32 %v499, %v24
    %502 = vset.pattern.permute.xlu0 1
    %503 = vperm.xlu0 %502, %v495
    %v504 = vpop.permute.xlu0 %503
    %v506 = vadd.f32 %v501, %v504
    %v507 = vmax.f32 %v506, 0.0
    %508 = vset.pattern.permute.xlu0 2
    %509 = vperm.xlu0 %508, %v495
    %v510 = vpop.permute.xlu0 %509
    %v512 = vmul.f32 %v507, %v510
    %v513 = vadd.f32 %v494, %v512
    %v514 = vld [vmem:[%s0 + $0xd0] sm:$0xff]
    %516 = vset.pattern.permute.xlu0 0
    %517 = vperm.xlu0 %516, %v514
    %v518 = vpop.permute.xlu0 %517
    %v520 = vmul.f32 %v518, %v24
    %521 = vset.pattern.permute.xlu0 1
    %522 = vperm.xlu0 %521, %v514
    %v523 = vpop.permute.xlu0 %522
    %v525 = vadd.f32 %v520, %v523
    %v526 = vmax.f32 %v525, 0.0
    %527 = vset.pattern.permute.xlu0 2
    %528 = vperm.xlu0 %527, %v514
    %v529 = vpop.permute.xlu0 %528
    %v531 = vmul.f32 %v526, %v529
    %v532 = vadd.f32 %v513, %v531
    %v533 = vld [vmem:[%s0 + $0xd8] sm:$0xff]
    %535 = vset.pattern.permute.xlu0 0
    %536 = vperm.xlu0 %535, %v533
    %v537 = vpop.permute.xlu0 %536
    %v539 = vmul.f32 %v537, %v24
    %540 = vset.pattern.permute.xlu0 1
    %541 = vperm.xlu0 %540, %v533
    %v542 = vpop.permute.xlu0 %541
    %v544 = vadd.f32 %v539, %v542
    %v545 = vmax.f32 %v544, 0.0
    %546 = vset.pattern.permute.xlu0 2
    %547 = vperm.xlu0 %546, %v533
    %v548 = vpop.permute.xlu0 %547
    %v550 = vmul.f32 %v545, %v548
    %v551 = vadd.f32 %v532, %v550
    %v552 = vld [vmem:[%s0 + $0xe0] sm:$0xff]
    %554 = vset.pattern.permute.xlu0 0
    %555 = vperm.xlu0 %554, %v552
    %v556 = vpop.permute.xlu0 %555
    %v558 = vmul.f32 %v556, %v24
    %559 = vset.pattern.permute.xlu0 1
    %560 = vperm.xlu0 %559, %v552
    %v561 = vpop.permute.xlu0 %560
    %v563 = vadd.f32 %v558, %v561
    %v564 = vmax.f32 %v563, 0.0
    %565 = vset.pattern.permute.xlu0 2
    %566 = vperm.xlu0 %565, %v552
    %v567 = vpop.permute.xlu0 %566
    %v569 = vmul.f32 %v564, %v567
    %v570 = vadd.f32 %v551, %v569
    %v571 = vld [vmem:[%s0 + $0xe8] sm:$0xff]
    %573 = vset.pattern.permute.xlu0 0
    %574 = vperm.xlu0 %573, %v571
    %v575 = vpop.permute.xlu0 %574
    %v577 = vmul.f32 %v575, %v24
    %578 = vset.pattern.permute.xlu0 1
    %579 = vperm.xlu0 %578, %v571
    %v580 = vpop.permute.xlu0 %579
    %v582 = vadd.f32 %v577, %v580
    %v583 = vmax.f32 %v582, 0.0
    %584 = vset.pattern.permute.xlu0 2
    %585 = vperm.xlu0 %584, %v571
    %v586 = vpop.permute.xlu0 %585
    %v588 = vmul.f32 %v583, %v586
    %v589 = vadd.f32 %v570, %v588
    %v590 = vld [vmem:[%s0 + $0xf0] sm:$0xff]
    %592 = vset.pattern.permute.xlu0 0
    %593 = vperm.xlu0 %592, %v590
    %v594 = vpop.permute.xlu0 %593
    %v596 = vmul.f32 %v594, %v24
    %597 = vset.pattern.permute.xlu0 1
    %598 = vperm.xlu0 %597, %v590
    %v599 = vpop.permute.xlu0 %598
    %v601 = vadd.f32 %v596, %v599
    %v602 = vmax.f32 %v601, 0.0
    %603 = vset.pattern.permute.xlu0 2
    %604 = vperm.xlu0 %603, %v590
    %v605 = vpop.permute.xlu0 %604
    %v607 = vmul.f32 %v602, %v605
    %v608 = vadd.f32 %v589, %v607
    %v609 = vld [vmem:[%s0 + $0xf8] sm:$0xff]
    %611 = vset.pattern.permute.xlu0 0
    %612 = vperm.xlu0 %611, %v609
    %v613 = vpop.permute.xlu0 %612
    %v615 = vmul.f32 %v613, %v24
    %616 = vset.pattern.permute.xlu0 1
    %617 = vperm.xlu0 %616, %v609
    %v618 = vpop.permute.xlu0 %617
    %v620 = vadd.f32 %v615, %v618
    %v621 = vmax.f32 %v620, 0.0
    %622 = vset.pattern.permute.xlu0 2
    %623 = vperm.xlu0 %622, %v609
    %v624 = vpop.permute.xlu0 %623
    %v626 = vmul.f32 %v621, %v624
    %v627 = vadd.f32 %v608, %v626
    %v628 = vrot.slane %v627, 4
    %v629 = vadd.f32 %v627, %v628
    %v630 = vrot.slane %v629, 2
    %v631 = vadd.f32 %v629, %v630
    %v632 = vrot.slane %v631, 1
    %v633 = vadd.f32 %v631, %v632
    %635 = vset.pattern.permute.xlu0 3
    %636 = vperm.xlu0 %635, %v12
    %v637 = vpop.permute.xlu0 %636
    %v639 = vadd.f32 %v633, %v637
    %v640 = vxor.u32 %v639, 2147483648
    %v641 = vmul.f32 %v640, 1.442695
    %v642 = vpow.pop %v641
    %v643 = vadd.f32 %v642, 1.0
    %v644 = vrcp.pop %v643
    %v645 = vmul.f32 1.0, %v644
    %646 = vst [vmem:[#allocation2] sm:$0x1] %v645
    // Predicated region
    $region10: #{tpu_custom_call.1} parent=1 // pred_check
      _
    $region11: #{tpu_custom_call.1} parent=1 // pred_check_branch
      %648 = sbr.rel (0) target = $region13
    $region12: #{tpu_custom_call.1} parent=1 // pred_region
      %s650 = ssub.s32 16, 16
      %651 = vsyncadd [#allocation3], %s650
      %s653 = sshll.u32 [#allocation2], 4
      %s654 = int_to_ptr.vmem [resolvable:$true] %s653
      %656 = dma.vmem_to_hbm [thread:$0]  %s654, 16, %s2, [#allocation3]
    $region13: #{tpu_custom_call.1} parent=1 // pred_fallthru
      _
    // Predicated region
    $region14: #{tpu_custom_call.1} parent=1 // pred_check
      _
    $region15: #{tpu_custom_call.1} parent=1 // pred_check_branch
      %658 = sbr.rel (0) target = $region17
    $region16: #{tpu_custom_call.1} parent=1 // pred_region
      %659 = dma.done [#allocation3], 16
    $region17: #{tpu_custom_call.1} parent=1 // pred_fallthru
      _
    %660 = vsyncpa [#allocation3], 1

</llo_original>
